<compile_context>
chip_gen: v5e
topology: v5e:2x2
jax: 0.10.0
libtpu: 0.0.40
codegen_flags: <defaults>
</compile_context>

<pallas_src>
import functools

import jax
import jax.numpy as jnp
from jax.experimental import pallas as pl
from jax.experimental.pallas import tpu as pltpu


def _channel_attention_kernel(x_ref, w1t_ref, w2t_ref, o_ref, sum_ref, max_ref,
                              *, s_total, s_blk):
    # x_ref:   (n_blk, C, s_blk) input tile (native dtype)
    # w1t_ref: (C, Ch)           first 1x1 conv weight, transposed (f32)
    # w2t_ref: (Ch, C)           second 1x1 conv weight, transposed (f32)
    # o_ref:   (n_blk, C)        sigmoid attention output
    # sum_ref/max_ref: (n_blk, C) f32 running accumulators (VMEM scratch)
    si = pl.program_id(1)
    ns = pl.num_programs(1)
    rem = s_total % s_blk  # static python int

    @pl.when(si == 0)
    def _init():
        sum_ref[...] = jnp.zeros_like(sum_ref)
        max_ref[...] = jnp.full_like(max_ref, -jnp.inf)

    x = x_ref[...]  # native dtype; f32 upcast fuses into the reductions below

    def _accumulate(xs, xm):
        # Sum accumulates directly in f32 (no full-tile f32 temp for bf16
        # inputs); max reduces in the native dtype and only the small
        # (n_blk, C) result is upcast.
        sum_ref[...] += jnp.sum(xs, axis=-1, dtype=jnp.float32)
        max_ref[...] = jnp.maximum(max_ref[...],
                                   jnp.max(xm, axis=-1).astype(jnp.float32))

    if rem == 0:
        _accumulate(x, x)
    else:
        # Interior tiles: unmasked single-pass sum + max.
        @pl.when(si < ns - 1)
        def _interior():
            _accumulate(x, x)

        # Tail tile: lanes past the true spatial extent hold whatever the
        # padded DMA brought in; jnp.where is a select, so that garbage (even
        # NaN) cannot propagate through the masked paths (0 for sum, -inf for
        # max).
        @pl.when(si == ns - 1)
        def _tail():
            lane = jax.lax.broadcasted_iota(jnp.int32, x.shape, dimension=2)
            valid = lane < rem
            zero = jnp.zeros((), dtype=x.dtype)
            ninf = jnp.array(-jnp.inf, dtype=x.dtype)
            _accumulate(jnp.where(valid, x, zero), jnp.where(valid, x, ninf))

    # Epilogue: tiny shared MLP + sigmoid, run exactly once per batch block.
    @pl.when(si == ns - 1)
    def _finalize():
        avg = sum_ref[...] * (1.0 / float(s_total))   # deferred mean divide
        mx = max_ref[...]
        # shared_MLP(avg) + shared_MLP(max): the second conv is linear, so add
        # the ReLU'd hidden activations and do a single second matmul (avoids
        # the sublane-axis concatenate relayout).
        h = (jnp.maximum(jnp.dot(avg, w1t_ref[...],
                                 preferred_element_type=jnp.float32), 0.0)
             + jnp.maximum(jnp.dot(mx, w1t_ref[...],
                                   preferred_element_type=jnp.float32), 0.0))
        logits = jnp.dot(h, w2t_ref[...], preferred_element_type=jnp.float32)
        o_ref[...] = jax.nn.sigmoid(logits).astype(o_ref.dtype)


def _split_batch(n):
    """Pick (n_grid, n_blk) with n_grid * n_blk == n, n_blk <= 8, and
    n_grid >= 2 whenever n >= 2 so megacore chips (v7x: 2 TCs) can shard the
    "parallel" grid axis across both TensorCores."""
    if n <= 1:
        return 1, max(n, 1)
    best = 1
    for b in range(1, min(8, n // 2) + 1):
        if n % b == 0:
            best = b
    return n // best, best


def _target_tile_bytes():
    """Per-input-buffer VMEM budget (sized at 4 B/elem regardless of dtype)."""
    try:
        kind = jax.devices()[0].device_kind.lower()
    except Exception:  # pragma: no cover - defensive; keep kernel usable anyway
        kind = ""
    if "v5" in kind and ("lite" in kind or "v5e" in kind):
        # v5e: 0.82 TB/s -> per-step overhead already small; keep VMEM modest.
        return 6 * 1024 * 1024
    # v6e / v7x (and default): large tiles to amortize the ~0.35 us grid-step
    # overhead against 1.4 / 3.2 TB/s HBM streams.
    return 12 * 1024 * 1024


def _pick_s_block(s, n_blk, c, target_bytes):
    # Budget computed at 4 B/elem so a potential f32 temporary of the active
    # tile can never blow past the requested VMEM limit (bf16 inputs then
    # simply stream 2x the elements per step for the same budget).
    per_col = max(1, n_blk * c * 4)
    max_s = max(128, (target_bytes // per_col) // 128 * 128)
    s_pad = pl.cdiv(s, 128) * 128
    return min(max_s, s_pad)


def channel_attention(x, w1, w2, *, s_block=None):
    """CBAM channel attention forward.

    x:  (N, C, *spatial)  -- NCHW / NCDHW, any number of trailing spatial dims.
    w1: (C//ratio, C)     -- first 1x1 conv weight (bias-free, kernel dims dropped).
    w2: (C, C//ratio)     -- second 1x1 conv weight (bias-free).
    Returns sigmoid attention of shape (N, C, 1, ..., 1).
    """
    N, C = x.shape[0], x.shape[1]
    spatial = x.shape[2:]
    S = 1
    for d in spatial:
        S *= int(d)
    Ch = w1.shape[0]

    n_grid, n_blk = _split_batch(N)
    # TODO(synk): for N == 1 a spatial-split parallel axis (partial pools
    # combined outside the kernel) would be needed to occupy both v7x
    # TensorCores; with N >= 2 the batch axis already gives >= 2 parallel blocks.

    target_bytes = _target_tile_bytes()
    s_blk = s_block if s_block is not None else _pick_s_block(S, n_blk, C, target_bytes)
    s_grid = pl.cdiv(S, s_blk)

    # Reshape the batch axis to (n_grid, n_blk): n_blk becomes a full dim of the
    # (squeezed-leading-dim) blocks, so it no longer needs to be a multiple of 8.
    x4 = x.reshape(n_grid, n_blk, C, S)               # keep original dtype
    w1t = jnp.transpose(w1).astype(jnp.float32)       # (C, Ch)
    w2t = jnp.transpose(w2).astype(jnp.float32)       # (Ch, C)

    # Explicit VMEM limit: double-buffered input tiles + headroom for any f32
    # temporaries; always above the default scoped limits, always below v7x's
    # 64 MiB physical VMEM.
    tile_budget = n_blk * C * s_blk * 4
    vmem_limit = int(max(16 * 1024 * 1024,
                         min(48 * 1024 * 1024, 3 * tile_budget + 8 * 1024 * 1024)))

    kernel = functools.partial(_channel_attention_kernel, s_total=S, s_blk=s_blk)

    out = pl.pallas_call(
        kernel,
        out_shape=jax.ShapeDtypeStruct((n_grid, n_blk, C), x.dtype),
        grid_spec=pltpu.PrefetchScalarGridSpec(
            num_scalar_prefetch=0,
            grid=(n_grid, s_grid),
            in_specs=[
                # Streamed input tiles (double-buffered by the pipeline);
                # leading batch-block dim squeezed out of the kernel ref.
                pl.BlockSpec((None, n_blk, C, s_blk),
                             lambda gi, si: (gi, 0, 0, si)),
                # Tiny weights: constant index_map -> stay resident in VMEM.
                pl.BlockSpec((C, Ch), lambda gi, si: (0, 0)),
                pl.BlockSpec((Ch, C), lambda gi, si: (0, 0)),
            ],
            out_specs=pl.BlockSpec((None, n_blk, C), lambda gi, si: (gi, 0, 0)),
            scratch_shapes=[
                pltpu.VMEM((n_blk, C), jnp.float32),   # running sum
                pltpu.VMEM((n_blk, C), jnp.float32),   # running max
            ],
        ),
        compiler_params=pltpu.CompilerParams(
            dimension_semantics=("parallel", "arbitrary"),
            vmem_limit_bytes=vmem_limit,
        ),
    )(x4, w1t, w2t)

    return out.reshape((N, C) + (1,) * len(spatial))


def channel_attention_ref(x, w1, w2):
    """Pure-JAX reference of the PyTorch forward (computed in f32)."""
    red_axes = tuple(range(2, x.ndim))
    xf = x.astype(jnp.float32)
    avg = jnp.mean(xf, axis=red_axes)
    mx = jnp.max(xf, axis=red_axes)
    w1f = w1.astype(jnp.float32)
    w2f = w2.astype(jnp.float32)

    def mlp(p):
        return jnp.maximum(p @ w1f.T, 0.0) @ w2f.T

    out = jax.nn.sigmoid(mlp(avg) + mlp(mx))
    return out.reshape(out.shape + (1,) * len(red_axes))


if __name__ == "__main__":
    def run_case(shape, ratio=16, dtype=jnp.float32, s_block=None,
                 atol=1e-5, rtol=1e-4):
        N, C = shape[0], shape[1]
        Ch = max(1, C // ratio)
        key = jax.random.PRNGKey(0)
        kx, k1, k2 = jax.random.split(key, 3)
        x = jax.random.normal(kx, shape, dtype=jnp.float32).astype(dtype)
        w1 = 0.1 * jax.random.normal(k1, (Ch, C), dtype=jnp.float32)  # Conv(C -> C//r, k=1)
        w2 = 0.1 * jax.random.normal(k2, (C, Ch), dtype=jnp.float32)  # Conv(C//r -> C, k=1)

        out = jax.block_until_ready(channel_attention(x, w1, w2, s_block=s_block))
        ref = channel_attention_ref(x, w1, w2)
        assert out.shape == (N, C) + (1,) * (len(shape) - 2), out.shape
        assert jnp.allclose(out.astype(jnp.float32), ref, atol=atol, rtol=rtol), \
            "mismatch vs reference"

    # Module config: in_channels=32, ratio=16 (hidden = 32 // 16 = 2).
    run_case((2, 32, 16, 16))                        # dim=2, aligned spatial, 2 parallel batch blocks
    run_case((3, 32, 13, 13), s_block=128)           # multi-tile stream + masked ragged tail
    run_case((2, 32, 6, 7, 8))                       # dim=3 (module default), masked tail
    run_case((3, 32, 13, 13), dtype=jnp.bfloat16,    # bf16 streaming path + masked tail
             s_block=128, atol=5e-3, rtol=1e-2)

    print("KERNEL_OK")
</pallas_src>

<mosaic_0001>
module attributes {stable_mosaic.version = 11 : i64} {
  func.func @_channel_attention_kernel(%arg0: i32, %arg1: i32, %arg2: memref<1x1x32x256xf32, #tpu.memory_space<vmem>>, %arg3: memref<32x2xf32, #tpu.memory_space<vmem>>, %arg4: memref<2x32xf32, #tpu.memory_space<vmem>>, %arg5: memref<1x1x32xf32, #tpu.memory_space<vmem>>, %arg6: memref<1x32xf32, #tpu.memory_space<vmem>>, %arg7: memref<1x32xf32, #tpu.memory_space<vmem>>) attributes {dimension_semantics = [#tpu.dimension_semantics<parallel>, #tpu.dimension_semantics<arbitrary>], iteration_bounds = array<i64: 2, 1>, scalar_prefetch = 0 : i64, scratch_operands = 2 : i64, tpu.core_type = #tpu.core_type<tc>, window_params = [{transform_indices = @transform_0, window_bounds = array<i64: 1, 1, 32, 256>}, {pipeline_mode = #tpu.pipeline_mode<synchronous>, transform_indices = @transform_1, window_bounds = array<i64: 32, 2>}, {pipeline_mode = #tpu.pipeline_mode<synchronous>, transform_indices = @transform_2, window_bounds = array<i64: 2, 32>}, {transform_indices = @transform_3, window_bounds = array<i64: 1, 1, 32>}]} {
    %c0_i32 = arith.constant 0 : i32
    %0 = arith.cmpi eq, %arg1, %c0_i32 : i32
    %1 = arith.extui %0 : i1 to i32
    %c0_i32_0 = arith.constant 0 : i32
    %2 = arith.cmpi ne, %1, %c0_i32_0 : i32
    scf.if %2 {
      %cst_15 = arith.constant 0.000000e+00 : f32
      %16 = vector.broadcast %cst_15 : f32 to vector<1x32xf32>
      %c0_16 = arith.constant 0 : index
      %c0_17 = arith.constant 0 : index
      %17 = vector.load %arg6[%c0_16, %c0_17] : memref<1x32xf32, #tpu.memory_space<vmem>>, vector<1x32xf32>
      tpu.vector_store %arg6[%c0_16, %c0_17], %16 {strides = array<i32>} : memref<1x32xf32, #tpu.memory_space<vmem>>, vector<1x32xf32>,
      %cst_18 = arith.constant 0xFF800000 : f32
      %18 = vector.broadcast %cst_18 : f32 to vector<1x32xf32>
      %c0_19 = arith.constant 0 : index
      %c0_20 = arith.constant 0 : index
      %19 = vector.load %arg7[%c0_19, %c0_20] : memref<1x32xf32, #tpu.memory_space<vmem>>, vector<1x32xf32>
      tpu.vector_store %arg7[%c0_19, %c0_20], %18 {strides = array<i32>} : memref<1x32xf32, #tpu.memory_space<vmem>>, vector<1x32xf32>,
    } else {
    }
    %c0 = arith.constant 0 : index
    %c0_1 = arith.constant 0 : index
    %c0_2 = arith.constant 0 : index
    %c0_3 = arith.constant 0 : index
    %3 = vector.load %arg2[%c0, %c0_1, %c0_2, %c0_3] : memref<1x1x32x256xf32, #tpu.memory_space<vmem>>, vector<1x1x32x256xf32>
    %4 = vector.shape_cast %3 : vector<1x1x32x256xf32> to vector<1x32x256xf32>
    %c0_4 = arith.constant 0 : index
    %c0_5 = arith.constant 0 : index
    %5 = vector.load %arg6[%c0_4, %c0_5] : memref<1x32xf32, #tpu.memory_space<vmem>>, vector<1x32xf32>
    %cst = arith.constant dense<0.000000e+00> : vector<1x32xf32>
    %6 = vector.multi_reduction <add>, %4, %cst [2] : vector<1x32x256xf32> to vector<1x32xf32>
    %7 = arith.addf %5, %6 : vector<1x32xf32>
    %c0_6 = arith.constant 0 : index
    %c0_7 = arith.constant 0 : index
    %8 = vector.load %arg6[%c0_6, %c0_7] : memref<1x32xf32, #tpu.memory_space<vmem>>, vector<1x32xf32>
    tpu.vector_store %arg6[%c0_6, %c0_7], %7 {strides = array<i32>} : memref<1x32xf32, #tpu.memory_space<vmem>>, vector<1x32xf32>,
    %c0_8 = arith.constant 0 : index
    %c0_9 = arith.constant 0 : index
    %9 = vector.load %arg7[%c0_8, %c0_9] : memref<1x32xf32, #tpu.memory_space<vmem>>, vector<1x32xf32>
    %cst_10 = arith.constant dense<0xFF800000> : vector<1x32xf32>
    %10 = vector.multi_reduction <maximumf>, %4, %cst_10 [2] : vector<1x32x256xf32> to vector<1x32xf32>
    %11 = arith.maximumf %9, %10 : vector<1x32xf32>
    %c0_11 = arith.constant 0 : index
    %c0_12 = arith.constant 0 : index
    %12 = vector.load %arg7[%c0_11, %c0_12] : memref<1x32xf32, #tpu.memory_space<vmem>>, vector<1x32xf32>
    tpu.vector_store %arg7[%c0_11, %c0_12], %11 {strides = array<i32>} : memref<1x32xf32, #tpu.memory_space<vmem>>, vector<1x32xf32>,
    %c0_i32_13 = arith.constant 0 : i32
    %13 = arith.cmpi eq, %arg1, %c0_i32_13 : i32
    %14 = arith.extui %13 : i1 to i32
    %c0_i32_14 = arith.constant 0 : i32
    %15 = arith.cmpi ne, %14, %c0_i32_14 : i32
    scf.if %15 {
      %c0_15 = arith.constant 0 : index
      %c0_16 = arith.constant 0 : index
      %16 = vector.load %arg6[%c0_15, %c0_16] : memref<1x32xf32, #tpu.memory_space<vmem>>, vector<1x32xf32>
      %cst_17 = arith.constant 3.906250e-03 : f32
      %17 = vector.broadcast %cst_17 : f32 to vector<1x32xf32>
      %18 = arith.mulf %16, %17 : vector<1x32xf32>
      %c0_18 = arith.constant 0 : index
      %c0_19 = arith.constant 0 : index
      %19 = vector.load %arg7[%c0_18, %c0_19] : memref<1x32xf32, #tpu.memory_space<vmem>>, vector<1x32xf32>
      %c0_20 = arith.constant 0 : index
      %c0_21 = arith.constant 0 : index
      %20 = vector.load %arg3[%c0_20, %c0_21] : memref<32x2xf32, #tpu.memory_space<vmem>>, vector<32x2xf32>
      %cst_22 = arith.constant dense<0.000000e+00> : vector<1x2xf32>
      %21 = tpu.matmul %18, %20, %cst_22 {dimension_numbers = #tpu.dot_dimension_numbers<[1], [0], [0], [1], [0, 0, 1, 1], [], []>} : vector<1x32xf32>, vector<32x2xf32>, vector<1x2xf32> -> vector<1x2xf32>
      %cst_23 = arith.constant 0.000000e+00 : f32
      %22 = vector.broadcast %cst_23 : f32 to vector<1x2xf32>
      %23 = arith.maximumf %21, %22 : vector<1x2xf32>
      %c0_24 = arith.constant 0 : index
      %c0_25 = arith.constant 0 : index
      %24 = vector.load %arg3[%c0_24, %c0_25] : memref<32x2xf32, #tpu.memory_space<vmem>>, vector<32x2xf32>
      %cst_26 = arith.constant dense<0.000000e+00> : vector<1x2xf32>
      %25 = tpu.matmul %19, %24, %cst_26 {dimension_numbers = #tpu.dot_dimension_numbers<[1], [0], [0], [1], [0, 0, 1, 1], [], []>} : vector<1x32xf32>, vector<32x2xf32>, vector<1x2xf32> -> vector<1x2xf32>
      %cst_27 = arith.constant 0.000000e+00 : f32
      %26 = vector.broadcast %cst_27 : f32 to vector<1x2xf32>
      %27 = arith.maximumf %25, %26 : vector<1x2xf32>
      %28 = arith.addf %23, %27 : vector<1x2xf32>
      %c0_28 = arith.constant 0 : index
      %c0_29 = arith.constant 0 : index
      %29 = vector.load %arg4[%c0_28, %c0_29] : memref<2x32xf32, #tpu.memory_space<vmem>>, vector<2x32xf32>
      %cst_30 = arith.constant dense<0.000000e+00> : vector<1x32xf32>
      %30 = tpu.matmul %28, %29, %cst_30 {dimension_numbers = #tpu.dot_dimension_numbers<[1], [0], [0], [1], [0, 0, 1, 1], [], []>} : vector<1x2xf32>, vector<2x32xf32>, vector<1x32xf32> -> vector<1x32xf32>
      %31 = arith.negf %30 : vector<1x32xf32>
      %32 = math.exp %31 : vector<1x32xf32>
      %cst_31 = arith.constant 1.000000e+00 : f32
      %33 = vector.broadcast %cst_31 : f32 to vector<1x32xf32>
      %34 = arith.addf %33, %32 : vector<1x32xf32>
      %35 = arith.divf %33, %34 : vector<1x32xf32>
      %c0_32 = arith.constant 0 : index
      %c0_33 = arith.constant 0 : index
      %c0_34 = arith.constant 0 : index
      %36 = vector.load %arg5[%c0_32, %c0_33, %c0_34] : memref<1x1x32xf32, #tpu.memory_space<vmem>>, vector<1x1x32xf32>
      %37 = vector.shape_cast %36 : vector<1x1x32xf32> to vector<1x32xf32>
      %38 = vector.shape_cast %35 : vector<1x32xf32> to vector<1x1x32xf32>
      tpu.vector_store %arg5[%c0_32, %c0_33, %c0_34], %38 {strides = array<i32>} : memref<1x1x32xf32, #tpu.memory_space<vmem>>, vector<1x1x32xf32>,
    } else {
    }
    return
  }
  func.func @transform_0(%arg0: i32, %arg1: i32) -> (i32, i32, i32, i32) {
    %c0_i32 = arith.constant 0 : i32
    %c0_i32_0 = arith.constant 0 : i32
    %c0_i32_1 = arith.constant 0 : i32
    return %arg0, %c0_i32, %c0_i32_0, %arg1 : i32, i32, i32, i32
  }
  func.func @transform_1(%arg0: i32, %arg1: i32) -> (i32, i32) {
    %c0_i32 = arith.constant 0 : i32
    %c0_i32_0 = arith.constant 0 : i32
    %c0_i32_1 = arith.constant 0 : i32
    return %c0_i32, %c0_i32_0 : i32, i32
  }
  func.func @transform_2(%arg0: i32, %arg1: i32) -> (i32, i32) {
    %c0_i32 = arith.constant 0 : i32
    %c0_i32_0 = arith.constant 0 : i32
    %c0_i32_1 = arith.constant 0 : i32
    return %c0_i32, %c0_i32_0 : i32, i32
  }
  func.func @transform_3(%arg0: i32, %arg1: i32) -> (i32, i32, i32) {
    %c0_i32 = arith.constant 0 : i32
    %c0_i32_0 = arith.constant 0 : i32
    %c0_i32_1 = arith.constant 0 : i32
    return %arg0, %c0_i32, %c0_i32_0 : i32, i32, i32
  }
}

</mosaic_0001>

<llo_original>
// kernel: tpu_custom_call.1
$region0: #{tpu_custom_call.1}
  #allocation0 [shape = 'u32[]', space=smem, size = 0x4, offset = 0x4, fixed_abs, tag = 'smem constant byte address 0x4 - core index']
  #allocation1 [shape = 'u32[72,128]{1,0:T(1,128)}', space=vmem, size = 0x9000, scoped, tag = 'internal scratch']
  #allocation2 [shape = 'f32[1,32]{1,0:T(1,128)}', space=vmem, size = 0x200, scoped, tag = 'scratch operand']
  #allocation3 [shape = 'f32[1,32]{1,0:T(1,128)}', space=vmem, size = 0x200, scoped, tag = 'scratch operand']
  %s0 = inlined_call_operand.hbm [shape: f32[2,1,32,256], index: 0, kind: input, shape index: {}]
  %s1 = inlined_call_operand.vmem [shape: f32[32,2], index: 1, kind: input, shape index: {}]
  %s2 = inlined_call_operand.vmem [shape: f32[2,32], index: 2, kind: input, shape index: {}]
  %s3 = inlined_call_operand.hbm [shape: f32[2,1,32], index: 3, kind: output, shape index: {}]
  %s4 = sld [smem:[#allocation0]]
  $region57: #{tpu_custom_call.1} parent=0
    _
  %s6 = ssub.s32 1, %s4
  %s7 = scalar_select 0, %s6, %s4
  $region1: #{tpu_custom_call.1} parent=0
    #allocation4 [shape = 'u8[65536]{0}', space=vmem, size = 0x10000, scoped, tag = 'input window, operand 0']
    #allocation5 [shape = 's32[2]{0}', space=sflag, size = 0x8, scoped, tag = 'scoped memory for tpu_custom_call.1']
    #allocation6 [shape = 's32[2]{0}', space=sflag, size = 0x8, scoped, tag = 'scoped memory for tpu_custom_call.1']
    #allocation7 [shape = 'u8[1024]{0}', space=vmem, size = 0x400, scoped, tag = 'output window, operand 0']
    %8 = vsyncpa [#allocation5], 0
    %s9 = scalar_lea.sflag [#allocation5], 1
    %10 = vsyncpa %s9, 0
    %11 = vsyncpa [#allocation6], 0
    %s12 = scalar_lea.sflag [#allocation6], 1
    %13 = vsyncpa %s12, 0
    loop: start=0, step=1, limit=4
    $region2: #{tpu_custom_call.1} parent=1 // loop_pre_header
      _
    $region3: #{tpu_custom_call.1} parent=1 // loop_header
      %s15 = sphi 0, %s19
      %p16 = scmp.ge.s32.totalorder %s15, 4
      %s22 = sphi 0, %s34
      %s23 = sphi 0, %s30
      %s24 = sphi 0, %s22
      %s25 = sphi 0, %s23
      %s26 = sphi 0, %s24
      %s27 = sphi 0, %s25
      %s39 = sphi 0, %s41
      %s42 = sphi 0, %s39
      %s43 = sphi 0, %s42
      %s59 = sphi 0, %s43
      %s63 = sphi 0, %s63
      %s65 = sphi 0, %s63
      %s66 = sphi 0, %s65
      %s80 = sphi 0, %s66
      %s84 = sphi 0, %s84
      %s86 = sphi 0, %s84
      %s87 = sphi 0, %s86
      %s101 = sphi 0, %s87
      %s107 = sphi 0, %s109
      %s110 = sphi 0, %s107
      %s111 = sphi 0, %s110
      %s127 = sphi 0, %s111
    $region4: #{tpu_custom_call.1} parent=1 // loop_header_branch
      %18 = sbr.rel (%p16) target = $region8
    $region5: #{tpu_custom_call.1} parent=1 // loop_body
      %s20 = ssub.s32 %s15, 1
      %s21 = ssub.s32 %s15, 2
      %s28 = sadd.s32 1, %s23
      %p29 = scmp.ge.s32.totalorder %s28, 1
      %s30 = scalar_select %p29, 0, %s28
      %s31 = sadd.s32 1, %s22
      %s32 = scalar_select %p29, %s31, %s22
      %p33 = scmp.ge.s32.totalorder %s32, 2
      %s34 = scalar_select %p33, 0, %s32
      %s35 = ssub.s32 %s22, %s34
      %s36 = ssub.s32 %s23, %s30
      %s37 = sor.u32 %s35, %s36
      %p38 = scmp.eq.s32.totalorder %s37, 0
      %s40 = sadd.s32 %s39, 1
      %s41 = scalar_select %p38, %s39, %s40
      %p44 = pneg %p38
      %p45 = scmp.eq.s32.totalorder %s15, 1
      %p46 = por %p44, %p45
      %p47 = scmp.ne.s32.totalorder %s39, %s42
      %p48 = scmp.eq.s32.totalorder %s15, 0
      %p49 = por %p47, %p48
      %p50 = scmp.ne.s32.totalorder %s39, %s42
      %p51 = scmp.eq.s32.totalorder %s20, 1
      %p52 = por %p50, %p51
      %p53 = scmp.ne.s32.totalorder %s42, %s43
      %p54 = scmp.eq.s32.totalorder %s20, 0
      %p55 = por %p53, %p54
      %p56 = scmp.ne.s32.totalorder %s42, %s43
      %p57 = scmp.eq.s32.totalorder %s21, 1
      %p58 = por %p56, %p57
      %p60 = scmp.ne.s32.totalorder %s43, %s59
      %p61 = scmp.eq.s32.totalorder %s21, 0
      %p62 = por %p60, %p61
      %s64 = sadd.s32 %s63, 1
      %p67 = scmp.eq.s32.totalorder %s15, 1
      %p68 = scmp.ne.s32.totalorder %s63, %s65
      %p69 = scmp.eq.s32.totalorder %s15, 0
      %p70 = por %p68, %p69
      %p71 = scmp.ne.s32.totalorder %s63, %s65
      %p72 = scmp.eq.s32.totalorder %s20, 1
      %p73 = por %p71, %p72
      %p74 = scmp.ne.s32.totalorder %s65, %s66
      %p75 = scmp.eq.s32.totalorder %s20, 0
      %p76 = por %p74, %p75
      %p77 = scmp.ne.s32.totalorder %s65, %s66
      %p78 = scmp.eq.s32.totalorder %s21, 1
      %p79 = por %p77, %p78
      %p81 = scmp.ne.s32.totalorder %s66, %s80
      %p82 = scmp.eq.s32.totalorder %s21, 0
      %p83 = por %p81, %p82
      %s85 = sadd.s32 %s84, 1
      %p88 = scmp.eq.s32.totalorder %s15, 1
      %p89 = scmp.ne.s32.totalorder %s84, %s86
      %p90 = scmp.eq.s32.totalorder %s15, 0
      %p91 = por %p89, %p90
      %p92 = scmp.ne.s32.totalorder %s84, %s86
      %p93 = scmp.eq.s32.totalorder %s20, 1
      %p94 = por %p92, %p93
      %p95 = scmp.ne.s32.totalorder %s86, %s87
      %p96 = scmp.eq.s32.totalorder %s20, 0
      %p97 = por %p95, %p96
      %p98 = scmp.ne.s32.totalorder %s86, %s87
      %p99 = scmp.eq.s32.totalorder %s21, 1
      %p100 = por %p98, %p99
      %p102 = scmp.ne.s32.totalorder %s87, %s101
      %p103 = scmp.eq.s32.totalorder %s21, 0
      %p104 = por %p102, %p103
      %s105 = ssub.s32 %s22, %s34
      %p106 = scmp.eq.s32.totalorder %s105, 0
      %s108 = sadd.s32 %s107, 1
      %s109 = scalar_select %p106, %s107, %s108
      %p112 = pneg %p106
      %p113 = scmp.eq.s32.totalorder %s15, 1
      %p114 = por %p112, %p113
      %p115 = scmp.ne.s32.totalorder %s107, %s110
      %p116 = scmp.eq.s32.totalorder %s15, 0
      %p117 = por %p115, %p116
      %p118 = scmp.ne.s32.totalorder %s107, %s110
      %p119 = scmp.eq.s32.totalorder %s20, 1
      %p120 = por %p118, %p119
      %p121 = scmp.ne.s32.totalorder %s110, %s111
      %p122 = scmp.eq.s32.totalorder %s20, 0
      %p123 = por %p121, %p122
      %p124 = scmp.ne.s32.totalorder %s110, %s111
      %p125 = scmp.eq.s32.totalorder %s21, 1
      %p126 = por %p124, %p125
      %p128 = scmp.ne.s32.totalorder %s111, %s127
      %p129 = scmp.eq.s32.totalorder %s21, 0
      %p130 = por %p128, %p129
      %p131 = scmp.le.s32.totalorder 1, %s15
      %p132 = scmp.lt.s32.totalorder %s15, 3
      %p133 = pnand %p131, %p132
      %p134 = pneg %p133
      // Predicated region
      $region9: #{tpu_custom_call.1} parent=5 // pred_check
        _
      $region10: #{tpu_custom_call.1} parent=5 // pred_check_branch
        %136 = sbr.rel (%p133) target = $region12
      $region11: #{tpu_custom_call.1} parent=5 // pred_region
        %s137 = ssub.s32 %s15, 1
        // Predicated region
        $region13: #{tpu_custom_call.1} parent=11 // pred_check
          %p138 = pneg %p76
        $region14: #{tpu_custom_call.1} parent=11 // pred_check_branch
          %140 = sbr.rel (%p138) target = $region16
        $region15: #{tpu_custom_call.1} parent=11 // pred_region
          _
        $region16: #{tpu_custom_call.1} parent=11 // pred_fallthru
          _
        // Predicated region
        $region17: #{tpu_custom_call.1} parent=11 // pred_check
          %p141 = pneg %p97
        $region18: #{tpu_custom_call.1} parent=11 // pred_check_branch
          %143 = sbr.rel (%p141) target = $region20
        $region19: #{tpu_custom_call.1} parent=11 // pred_region
          _
        $region20: #{tpu_custom_call.1} parent=11 // pred_fallthru
          _
      $region12: #{tpu_custom_call.1} parent=5 // pred_fallthru
        _
      %p144 = scmp.lt.s32.totalorder %s15, 2
      // Predicated region
      $region21: #{tpu_custom_call.1} parent=5 // pred_check
        %p145 = pneg %p144
      $region22: #{tpu_custom_call.1} parent=5 // pred_check_branch
        %147 = sbr.rel (%p145) target = $region24
      $region23: #{tpu_custom_call.1} parent=5 // pred_region
        // Predicated region
        $region25: #{tpu_custom_call.1} parent=23 // pred_check
          %p148 = pneg %p49
        $region26: #{tpu_custom_call.1} parent=23 // pred_check_branch
          %150 = sbr.rel (%p148) target = $region28
        $region27: #{tpu_custom_call.1} parent=23 // pred_region
          %s151 = sand.u32 %s39, 1
          %s152 = scalar_lea.sflag [#allocation5], %s151
          %s153 = sand.u32 %s39, 1
          %s154 = smul.addr %s153, 64
          %s155 = scalar_lea.vmem [#allocation4], %s154
          %s156 = smul.u32 2, %s23
          %158 = vsyncadd %s152, 0
          %s159 = smul.addr %s22, 8
          %s160 = sadd.s32 %s156, %s159
          %s161 = smul.addr %s160, 8
          %s162 = scalar_lea.hbm %s0, %s161
          %s163 = sshll.u32 %s162, 4
          %s164 = int_to_ptr.hbm [resolvable:$true] %s163
          %s165 = sshll.u32 %s155, 4
          %s166 = int_to_ptr.vmem [resolvable:$true] %s165
          %171 = dma.hbm_to_vmem [thread:$0]  %s164, 1024, %s166, %s152, 256, 256, 16
        $region28: #{tpu_custom_call.1} parent=23 // pred_fallthru
          _
      $region24: #{tpu_custom_call.1} parent=5 // pred_fallthru
        _
      %p172 = scmp.le.s32.totalorder 1, %s15
      %p173 = scmp.lt.s32.totalorder %s15, 3
      %p174 = pnand %p172, %p173
      %p175 = pneg %p174
      // Predicated region
      $region29: #{tpu_custom_call.1} parent=5 // pred_check
        _
      $region30: #{tpu_custom_call.1} parent=5 // pred_check_branch
        %177 = sbr.rel (%p174) target = $region32
      $region31: #{tpu_custom_call.1} parent=5 // pred_region
        %s178 = ssub.s32 %s15, 1
        %s179 = sand.u32 %s42, 1
        %s180 = scalar_lea.sflag [#allocation5], %s179
        %s181 = sand.u32 %s42, 1
        %s182 = smul.addr %s181, 64
        %s183 = scalar_lea.vmem [#allocation4], %s182
        // Predicated region
        $region33: #{tpu_custom_call.1} parent=31 // pred_check
          %p184 = pneg %p55
        $region34: #{tpu_custom_call.1} parent=31 // pred_check_branch
          %186 = sbr.rel (%p184) target = $region36
        $region35: #{tpu_custom_call.1} parent=31 // pred_region
          %188 = dma.done %s180, 1024
        $region36: #{tpu_custom_call.1} parent=31 // pred_fallthru
          _
        %s189 = sand.u32 %s42, 1
        %s190 = scalar_lea.sflag [#allocation5], %s189
        %s191 = sand.u32 %s42, 1
        %s192 = smul.addr %s191, 64
        %s193 = scalar_lea.vmem [#allocation4], %s192
        %p194 = pneg %p55
        %p195 = pneg %p52
        %p196 = pneg %p76
        %p197 = pneg %p73
        %p198 = pneg %p97
        %p199 = pneg %p94
        %p200 = pneg %p123
        %p201 = pneg %p120
        %s202 = sand.u32 %s110, 1
        %s203 = scalar_lea.sflag [#allocation6], %s202
        %s204 = sand.u32 %s110, 1
        %s205 = scalar_lea.vmem [#allocation7], %s204
        %s206 = smul.u32 2, %s25
        %p207 = scmp.eq.s32.totalorder %s25, 0
        // Predicated region
        $region37: #{tpu_custom_call.1} parent=31 // pred_check
          %p208 = pneg %p207
        $region38: #{tpu_custom_call.1} parent=31 // pred_check_branch
          %210 = sbr.rel (%p208) target = $region40
        $region39: #{tpu_custom_call.1} parent=31 // pred_region
          %vm211 = vcmask 253952
          %212 = vst.msk [vmem:[#allocation2] sm:$0x1] %vm211, 0.0
          %213 = vst.msk [vmem:[#allocation3] sm:$0x1] %vm211, -inf
        $region40: #{tpu_custom_call.1} parent=31 // pred_fallthru
          _
        %v214 = vld [vmem:[%s183] sm:$0xff]
        %v215 = vld [vmem:[%s183 + $0x8] sm:$0xff]
        %v216 = vld [vmem:[%s183 + $0x10] sm:$0xff]
        %v217 = vld [vmem:[%s183 + $0x18] sm:$0xff]
        %v218 = vld [vmem:[%s183 + $0x20] sm:$0xff]
        %v219 = vld [vmem:[%s183 + $0x28] sm:$0xff]
        %v220 = vld [vmem:[%s183 + $0x30] sm:$0xff]
        %v221 = vld [vmem:[%s183 + $0x38] sm:$0xff]
        %v222 = vld [vmem:[#allocation2] sm:$0x1]
        %v223 = vadd.f32 %v214, %v215
        %224 = vadd.xlane.f32.xlu0 %v223
        %v225 = vpop.xlane.xlu0 %224
        %v226 = vadd.f32 %v216, %v217
        %227 = vadd.xlane.f32.xlu0 %v226
        %v228 = vpop.xlane.xlu0 %227
        %v229 = vadd.f32 %v218, %v219
        %230 = vadd.xlane.f32.xlu0 %v229
        %v231 = vpop.xlane.xlu0 %230
        %v232 = vadd.f32 %v220, %v221
        %233 = vadd.xlane.f32.xlu0 %v232
        %v234 = vpop.xlane.xlu0 %233
        %v239 = vperm.slane %v225, 0
        %v240 = vperm.slane %v225, 1
        %v241 = vperm.slane %v225, 2
        %v242 = vperm.slane %v225, 3
        %v243 = vperm.slane %v225, 4
        %v244 = vperm.slane %v225, 5
        %v245 = vperm.slane %v225, 6
        %v246 = vperm.slane %v225, 7
        %v247 = vperm.slane %v228, 0
        %v248 = vperm.slane %v228, 1
        %v249 = vperm.slane %v228, 2
        %v250 = vperm.slane %v228, 3
        %v251 = vperm.slane %v228, 4
        %v252 = vperm.slane %v228, 5
        %v253 = vperm.slane %v228, 6
        %v254 = vperm.slane %v228, 7
        %v255 = vperm.slane %v231, 0
        %v256 = vperm.slane %v231, 1
        %v257 = vperm.slane %v231, 2
        %v258 = vperm.slane %v231, 3
        %v259 = vperm.slane %v231, 4
        %v260 = vperm.slane %v231, 5
        %v261 = vperm.slane %v231, 6
        %v262 = vperm.slane %v231, 7
        %v263 = vperm.slane %v234, 0
        %v264 = vperm.slane %v234, 1
        %v265 = vperm.slane %v234, 2
        %v266 = vperm.slane %v234, 3
        %v267 = vperm.slane %v234, 4
        %v268 = vperm.slane %v234, 5
        %v269 = vperm.slane %v234, 6
        %v270 = vperm.slane %v234, 7
        %271 = vst [vmem:[#allocation1] ss:$9 sm:$0xff] %v239
        %s272 = scalar_lea.vmem [#allocation1], 1
        %273 = vst [vmem:[%s272] ss:$9 sm:$0xff] %v240
        %s274 = scalar_lea.vmem [#allocation1], 2
        %275 = vst [vmem:[%s274] ss:$9 sm:$0xff] %v241
        %s276 = scalar_lea.vmem [#allocation1], 3
        %277 = vst [vmem:[%s276] ss:$9 sm:$0xff] %v242
        %s278 = scalar_lea.vmem [#allocation1], 4
        %279 = vst [vmem:[%s278] ss:$9 sm:$0xff] %v243
        %s280 = scalar_lea.vmem [#allocation1], 5
        %281 = vst [vmem:[%s280] ss:$9 sm:$0xff] %v244
        %s282 = scalar_lea.vmem [#allocation1], 6
        %283 = vst [vmem:[%s282] ss:$9 sm:$0xff] %v245
        %s284 = scalar_lea.vmem [#allocation1], 7
        %285 = vst [vmem:[%s284] ss:$9 sm:$0xff] %v246
        %v286 = vld [vmem:[#allocation1] sm:$0xff]
        %287 = vst [vmem:[#allocation1] ss:$9 sm:$0xff] %v247
        %288 = vst [vmem:[%s272] ss:$9 sm:$0xff] %v248
        %289 = vst [vmem:[%s274] ss:$9 sm:$0xff] %v249
        %290 = vst [vmem:[%s276] ss:$9 sm:$0xff] %v250
        %291 = vst [vmem:[%s278] ss:$9 sm:$0xff] %v251
        %292 = vst [vmem:[%s280] ss:$9 sm:$0xff] %v252
        %293 = vst [vmem:[%s282] ss:$9 sm:$0xff] %v253
        %294 = vst [vmem:[%s284] ss:$9 sm:$0xff] %v254
        %v295 = vld [vmem:[#allocation1] sm:$0xff]
        %296 = vst [vmem:[#allocation1] ss:$9 sm:$0xff] %v255
        %297 = vst [vmem:[%s272] ss:$9 sm:$0xff] %v256
        %298 = vst [vmem:[%s274] ss:$9 sm:$0xff] %v257
        %299 = vst [vmem:[%s276] ss:$9 sm:$0xff] %v258
        %300 = vst [vmem:[%s278] ss:$9 sm:$0xff] %v259
        %301 = vst [vmem:[%s280] ss:$9 sm:$0xff] %v260
        %302 = vst [vmem:[%s282] ss:$9 sm:$0xff] %v261
        %303 = vst [vmem:[%s284] ss:$9 sm:$0xff] %v262
        %v304 = vld [vmem:[#allocation1] sm:$0xff]
        %305 = vst [vmem:[#allocation1] ss:$9 sm:$0xff] %v263
        %306 = vst [vmem:[%s272] ss:$9 sm:$0xff] %v264
        %307 = vst [vmem:[%s274] ss:$9 sm:$0xff] %v265
        %308 = vst [vmem:[%s276] ss:$9 sm:$0xff] %v266
        %309 = vst [vmem:[%s278] ss:$9 sm:$0xff] %v267
        %310 = vst [vmem:[%s280] ss:$9 sm:$0xff] %v268
        %311 = vst [vmem:[%s282] ss:$9 sm:$0xff] %v269
        %312 = vst [vmem:[%s284] ss:$9 sm:$0xff] %v270
        %v313 = vld [vmem:[#allocation1] sm:$0xff]
        %314 = vset.pattern.permute.xlu0 0
        %315 = vperm.xlu0 %314, %v286
        %v316 = vpop.permute.xlu0 %315
        %317 = vset.pattern.permute.xlu0 0
        %318 = vperm.xlu0 %317, %v295
        %v319 = vpop.permute.xlu0 %318
        %320 = vset.pattern.permute.xlu0 0
        %321 = vperm.xlu0 %320, %v304
        %v322 = vpop.permute.xlu0 %321
        %323 = vset.pattern.permute.xlu0 0
        %324 = vperm.xlu0 %323, %v313
        %v325 = vpop.permute.xlu0 %324
        %v326 = vlaneseq
        %v327 = vand.u32 %v326, 127
        %v328 = vperm.slane %v316, %v327
        %v329 = vadd.s32 %v327, 4294967288
        %v330 = vperm.slane %v319, %v329
        %vm331 = vcmask 130112
        %v332 = vsel %vm331, %v330, %v328
        %v333 = vadd.s32 %v327, 4294967280
        %v334 = vperm.slane %v322, %v333
        %vm335 = vcmask 195712
        %v336 = vsel %vm335, %v334, %v332
        %v337 = vadd.s32 %v327, 4294967272
        %v338 = vperm.slane %v325, %v337
        %vm339 = vcmask 261312
        %v340 = vsel %vm339, %v338, %v336
        %v342 = vadd.f32 %v222, %v340
        %vm343 = vcmask 253952
        %344 = vst.msk [vmem:[#allocation2] sm:$0x1] %vm343, %v342
        %v345 = vld [vmem:[#allocation3] sm:$0x1]
        %v346 = vmax.f32 %v214, %v215
        %347 = vmax.xlane.f32.xlu0 %v346
        %v348 = vpop.xlane.xlu0 %347
        %v349 = vmax.f32 %v216, %v217
        %350 = vmax.xlane.f32.xlu0 %v349
        %v351 = vpop.xlane.xlu0 %350
        %v352 = vmax.f32 %v218, %v219
        %353 = vmax.xlane.f32.xlu0 %v352
        %v354 = vpop.xlane.xlu0 %353
        %v355 = vmax.f32 %v220, %v221
        %356 = vmax.xlane.f32.xlu0 %v355
        %v357 = vpop.xlane.xlu0 %356
        %v362 = vperm.slane %v348, 0
        %v363 = vperm.slane %v348, 1
        %v364 = vperm.slane %v348, 2
        %v365 = vperm.slane %v348, 3
        %v366 = vperm.slane %v348, 4
        %v367 = vperm.slane %v348, 5
        %v368 = vperm.slane %v348, 6
        %v369 = vperm.slane %v348, 7
        %v370 = vperm.slane %v351, 0
        %v371 = vperm.slane %v351, 1
        %v372 = vperm.slane %v351, 2
        %v373 = vperm.slane %v351, 3
        %v374 = vperm.slane %v351, 4
        %v375 = vperm.slane %v351, 5
        %v376 = vperm.slane %v351, 6
        %v377 = vperm.slane %v351, 7
        %v378 = vperm.slane %v354, 0
        %v379 = vperm.slane %v354, 1
        %v380 = vperm.slane %v354, 2
        %v381 = vperm.slane %v354, 3
        %v382 = vperm.slane %v354, 4
        %v383 = vperm.slane %v354, 5
        %v384 = vperm.slane %v354, 6
        %v385 = vperm.slane %v354, 7
        %v386 = vperm.slane %v357, 0
        %v387 = vperm.slane %v357, 1
        %v388 = vperm.slane %v357, 2
        %v389 = vperm.slane %v357, 3
        %v390 = vperm.slane %v357, 4
        %v391 = vperm.slane %v357, 5
        %v392 = vperm.slane %v357, 6
        %v393 = vperm.slane %v357, 7
        %394 = vst [vmem:[#allocation1] ss:$9 sm:$0xff] %v362
        %s395 = scalar_lea.vmem [#allocation1], 1
        %396 = vst [vmem:[%s395] ss:$9 sm:$0xff] %v363
        %s397 = scalar_lea.vmem [#allocation1], 2
        %398 = vst [vmem:[%s397] ss:$9 sm:$0xff] %v364
        %s399 = scalar_lea.vmem [#allocation1], 3
        %400 = vst [vmem:[%s399] ss:$9 sm:$0xff] %v365
        %s401 = scalar_lea.vmem [#allocation1], 4
        %402 = vst [vmem:[%s401] ss:$9 sm:$0xff] %v366
        %s403 = scalar_lea.vmem [#allocation1], 5
        %404 = vst [vmem:[%s403] ss:$9 sm:$0xff] %v367
        %s405 = scalar_lea.vmem [#allocation1], 6
        %406 = vst [vmem:[%s405] ss:$9 sm:$0xff] %v368
        %s407 = scalar_lea.vmem [#allocation1], 7
        %408 = vst [vmem:[%s407] ss:$9 sm:$0xff] %v369
        %v409 = vld [vmem:[#allocation1] sm:$0xff]
        %410 = vst [vmem:[#allocation1] ss:$9 sm:$0xff] %v370
        %411 = vst [vmem:[%s395] ss:$9 sm:$0xff] %v371
        %412 = vst [vmem:[%s397] ss:$9 sm:$0xff] %v372
        %413 = vst [vmem:[%s399] ss:$9 sm:$0xff] %v373
        %414 = vst [vmem:[%s401] ss:$9 sm:$0xff] %v374
        %415 = vst [vmem:[%s403] ss:$9 sm:$0xff] %v375
        %416 = vst [vmem:[%s405] ss:$9 sm:$0xff] %v376
        %417 = vst [vmem:[%s407] ss:$9 sm:$0xff] %v377
        %v418 = vld [vmem:[#allocation1] sm:$0xff]
        %419 = vst [vmem:[#allocation1] ss:$9 sm:$0xff] %v378
        %420 = vst [vmem:[%s395] ss:$9 sm:$0xff] %v379
        %421 = vst [vmem:[%s397] ss:$9 sm:$0xff] %v380
        %422 = vst [vmem:[%s399] ss:$9 sm:$0xff] %v381
        %423 = vst [vmem:[%s401] ss:$9 sm:$0xff] %v382
        %424 = vst [vmem:[%s403] ss:$9 sm:$0xff] %v383
        %425 = vst [vmem:[%s405] ss:$9 sm:$0xff] %v384
        %426 = vst [vmem:[%s407] ss:$9 sm:$0xff] %v385
        %v427 = vld [vmem:[#allocation1] sm:$0xff]
        %428 = vst [vmem:[#allocation1] ss:$9 sm:$0xff] %v386
        %429 = vst [vmem:[%s395] ss:$9 sm:$0xff] %v387
        %430 = vst [vmem:[%s397] ss:$9 sm:$0xff] %v388
        %431 = vst [vmem:[%s399] ss:$9 sm:$0xff] %v389
        %432 = vst [vmem:[%s401] ss:$9 sm:$0xff] %v390
        %433 = vst [vmem:[%s403] ss:$9 sm:$0xff] %v391
        %434 = vst [vmem:[%s405] ss:$9 sm:$0xff] %v392
        %435 = vst [vmem:[%s407] ss:$9 sm:$0xff] %v393
        %v436 = vld [vmem:[#allocation1] sm:$0xff]
        %437 = vset.pattern.permute.xlu0 0
        %438 = vperm.xlu0 %437, %v409
        %v439 = vpop.permute.xlu0 %438
        %440 = vset.pattern.permute.xlu0 0
        %441 = vperm.xlu0 %440, %v418
        %v442 = vpop.permute.xlu0 %441
        %443 = vset.pattern.permute.xlu0 0
        %444 = vperm.xlu0 %443, %v427
        %v445 = vpop.permute.xlu0 %444
        %446 = vset.pattern.permute.xlu0 0
        %447 = vperm.xlu0 %446, %v436
        %v448 = vpop.permute.xlu0 %447
        %v449 = vperm.slane %v439, %v327
        %v450 = vperm.slane %v442, %v329
        %v451 = vsel %vm331, %v450, %v449
        %v452 = vperm.slane %v445, %v333
        %v453 = vsel %vm335, %v452, %v451
        %v454 = vperm.slane %v448, %v337
        %v455 = vsel %vm339, %v454, %v453
        %v457 = vmax.f32 %v345, %v455
        %458 = vst.msk [vmem:[#allocation3] sm:$0x1] %vm343, %v457
        // Predicated region
        $region41: #{tpu_custom_call.1} parent=31 // pred_check
          %p459 = pneg %p207
        $region42: #{tpu_custom_call.1} parent=31 // pred_check_branch
          %461 = sbr.rel (%p459) target = $region44
        $region43: #{tpu_custom_call.1} parent=31 // pred_region
          %v462 = vld [vmem:[#allocation2] sm:$0x1]
          %v463 = vmul.f32 %v462, 0.00390625
          %v464 = vld [vmem:[#allocation3] sm:$0x1]
          %v465 = vld [vmem:[%s1] sm:$0xff]
          %v466 = vld [vmem:[%s1 + $0x8] sm:$0xff]
          %v467 = vld [vmem:[%s1 + $0x10] sm:$0xff]
          %v468 = vld [vmem:[%s1 + $0x18] sm:$0xff]
          %vm469 = vcmask 261120
          %v471 = vsel %vm469, %v463, 0
          %473 = vmatpush.msra.mxu0 0.0
          %474 = vmatpush.msra.mxu0 0.0
          %475 = vmatpush.msra.mxu0 0.0
          %476 = vmatpush.msra.mxu0 0.0
          %477 = vmatpush.msra.mxu0 0.0
          %478 = vmatpush.msra.mxu0 0.0
          %479 = vmatpush.msra.mxu0 0.0
          %480 = vmatpush.msra.mxu0 0.0
          %481 = vmatpush.msra.mxu0 0.0
          %482 = vmatpush.msra.mxu0 0.0
          %483 = vmatpush.msra.mxu0 0.0
          %484 = vmatpush.msra.mxu0 0.0
          %485 = vmatpush.msra.mxu0 %v468
          %486 = vmatpush.msra.mxu0 %v467
          %487 = vmatpush.msra.mxu0 %v466
          %488 = vmatpush.msra.mxu0 %v465
          %489 = vmatmul.f32.gmra.mxu0 %v471
          %v490 = vpop.f32.mrf.mxu0
          %v491 = vadd.f32 0.0, %v490
          %492 = vdwg.mxu0
          %v493 = vmax.f32 %v491, 0.0
          %v495 = vsel %vm469, %v464, 0
          %497 = vmatpush.msra.mxu0 0.0
          %498 = vmatpush.msra.mxu0 0.0
          %499 = vmatpush.msra.mxu0 0.0
          %500 = vmatpush.msra.mxu0 0.0
          %501 = vmatpush.msra.mxu0 0.0
          %502 = vmatpush.msra.mxu0 0.0
          %503 = vmatpush.msra.mxu0 0.0
          %504 = vmatpush.msra.mxu0 0.0
          %505 = vmatpush.msra.mxu0 0.0
          %506 = vmatpush.msra.mxu0 0.0
          %507 = vmatpush.msra.mxu0 0.0
          %508 = vmatpush.msra.mxu0 0.0
          %509 = vmatpush.msra.mxu0 %v468
          %510 = vmatpush.msra.mxu0 %v467
          %511 = vmatpush.msra.mxu0 %v466
          %512 = vmatpush.msra.mxu0 %v465
          %513 = vmatmul.f32.gmra.mxu0 %v495
          %v514 = vpop.f32.mrf.mxu0
          %v515 = vadd.f32 0.0, %v514
          %516 = vdwg.mxu0
          %v517 = vmax.f32 %v515, 0.0
          %v518 = vadd.f32 %v493, %v517
          %v519 = vld [vmem:[%s2] sm:$0x3]
          %vm520 = vcmask 15360
          %v522 = vsel %vm520, %v518, 0
          %vm524 = vcmask 1041408
          %v526 = vsel %vm524, %v519, 0
          %528 = vmatpush.msra.mxu0 0.0
          %529 = vmatpush.msra.mxu0 0.0
          %530 = vmatpush.msra.mxu0 0.0
          %531 = vmatpush.msra.mxu0 0.0
          %532 = vmatpush.msra.mxu0 0.0
          %533 = vmatpush.msra.mxu0 0.0
          %534 = vmatpush.msra.mxu0 0.0
          %535 = vmatpush.msra.mxu0 0.0
          %536 = vmatpush.msra.mxu0 0.0
          %537 = vmatpush.msra.mxu0 0.0
          %538 = vmatpush.msra.mxu0 0.0
          %539 = vmatpush.msra.mxu0 0.0
          %540 = vmatpush.msra.mxu0 0.0
          %541 = vmatpush.msra.mxu0 0.0
          %542 = vmatpush.msra.mxu0 0.0
          %543 = vmatpush.msra.mxu0 %v526
          %544 = vmatmul.f32.gmra.mxu0 %v522
          %v545 = vpop.f32.mrf.mxu0
          %v546 = vadd.f32 0.0, %v545
          %547 = vdwg.mxu0
          %v548 = vxor.u32 %v546, 2147483648
          %v549 = vmul.f32 %v548, 1.442695
          %v550 = vpow.pop %v549
          %v551 = vadd.f32 %v550, 1.0
          %v552 = vrcp.pop %v551
          %v553 = vmul.f32 %v551, %v552
          %v554 = vsub.f32 1.0, %v553
          %v555 = vmul.f32 %v552, %v554
          %v556 = vadd.f32 %v552, %v555
          %vm557 = vweird.f32 %v551
          %vm558 = vweird.f32 %v552
          %vm559 = vmor %vm557, %vm558
          %v560 = vsel %vm559, %v552, %v556
          %v561 = vand.u32 2147483647, %v551
          %vm562 = vcmp.eq.f32.partialorder %v561, 8.507059e+37
          %v563 = vand.u32 %v551, 2147483648
          %v564 = vor.u32 1.1754944e-38, %v563
          %v565 = vsel %vm562, %v564, %v560
          %v566 = vmul.f32 1.0, %v565
          %567 = vst.msk [vmem:[%s205] sm:$0x1] %vm343, %v566
        $region44: #{tpu_custom_call.1} parent=31 // pred_fallthru
          _
        %s568 = sand.u32 %s110, 1
        %s569 = scalar_lea.sflag [#allocation6], %s568
        %s570 = sand.u32 %s110, 1
        %s571 = scalar_lea.vmem [#allocation7], %s570
        // Predicated region
        $region45: #{tpu_custom_call.1} parent=31 // pred_check
          %p572 = pneg %p120
        $region46: #{tpu_custom_call.1} parent=31 // pred_check_branch
          %574 = sbr.rel (%p572) target = $region48
        $region47: #{tpu_custom_call.1} parent=31 // pred_region
          %576 = vsyncadd %s569, 0
          %s577 = scalar_lea.hbm %s3, %s24
          %s579 = sshll.u32 %s571, 4
          %s580 = int_to_ptr.vmem [resolvable:$true] %s579
          %s581 = sshll.u32 %s577, 4
          %s582 = int_to_ptr.hbm [resolvable:$true] %s581
          %584 = dma.vmem_to_hbm [thread:$0]  %s580, 16, %s582, %s569
        $region48: #{tpu_custom_call.1} parent=31 // pred_fallthru
          _
      $region32: #{tpu_custom_call.1} parent=5 // pred_fallthru
        _
      %p585 = scmp.le.s32.totalorder 2, %s15
      // Predicated region
      $region49: #{tpu_custom_call.1} parent=5 // pred_check
        %p586 = pneg %p585
      $region50: #{tpu_custom_call.1} parent=5 // pred_check_branch
        %588 = sbr.rel (%p586) target = $region52
      $region51: #{tpu_custom_call.1} parent=5 // pred_region
        %s589 = ssub.s32 %s15, 2
        // Predicated region
        $region53: #{tpu_custom_call.1} parent=51 // pred_check
          %p590 = pneg %p126
        $region54: #{tpu_custom_call.1} parent=51 // pred_check_branch
          %592 = sbr.rel (%p590) target = $region56
        $region55: #{tpu_custom_call.1} parent=51 // pred_region
          %s593 = sand.u32 %s111, 1
          %s594 = scalar_lea.sflag [#allocation6], %s593
          %s595 = sand.u32 %s111, 1
          %s596 = scalar_lea.vmem [#allocation7], %s595
          %598 = dma.done %s594, 16
        $region56: #{tpu_custom_call.1} parent=51 // pred_fallthru
          _
      $region52: #{tpu_custom_call.1} parent=5 // pred_fallthru
        _
    $region6: #{tpu_custom_call.1} parent=1 // loop_footer
      %s19 = sadd.s32 1, %s15
    $region7: #{tpu_custom_call.1} parent=1 // loop_footer_branch
      %14 = sbr.rel target = $region3
    $region8: #{tpu_custom_call.1} parent=1 // loop_exit
      _
    %599 = vsyncpa [#allocation5], 1
    %s600 = scalar_lea.sflag [#allocation5], 1
    %601 = vsyncpa %s600, 1
    %602 = vsyncpa [#allocation6], 1
    %s603 = scalar_lea.sflag [#allocation6], 1
    %604 = vsyncpa %s603, 1

</llo_original>
